<compile_context>
chip_gen: v7x
topology: tpu7x:2x2x1
jax: 0.10.0
libtpu: 0.0.40
codegen_flags: <defaults>
</compile_context>

<pallas_src>
import functools

import jax
import jax.numpy as jnp
from jax.experimental import pallas as pl
from jax.experimental.pallas import tpu as pltpu

HIDDEN = 100     # hidden width of the PyTorch module
LANE = 128       # TPU lane width; all feature dims padded to this
N_LAYERS = 5


def _round_up(n, m):
    return ((n + m - 1) // m) * m


def _fan_ins_padded(d_in):
    return (_round_up(d_in, LANE),) + (LANE,) * (N_LAYERS - 1)


def popnet_kernel(x_ref, w_ref, b_ref, o_ref, *, row_offsets):
    """One batch tile of the full 5-layer MLP.

    x_ref: (TILE_B, d_in_pad)        bf16  padded input activations
    w_ref: (sum(fan_in_pad), 128)    bf16  all 5 weight matrices stacked on rows
    b_ref: (N_LAYERS, 128)           f32   all 5 biases
    o_ref: (TILE_B, 128)             f32   padded output (first d_out lanes valid)
    """
    h = x_ref[...]                                    # bf16 operand for layer 1
    for l in range(N_LAYERS):
        w = w_ref[row_offsets[l]:row_offsets[l + 1], :]            # bf16 (K, 128), static slice
        acc = jnp.dot(h, w, preferred_element_type=jnp.float32)    # MXU, f32 accumulate
        h = acc + b_ref[l:l + 1, :]                                # bias in f32
        if l < N_LAYERS - 1:
            h = jnp.maximum(h, 0.0)                                # ReLU in f32 (Dropout == identity, eval mode)
            h = h.astype(jnp.bfloat16)                             # bf16 operand for next matmul
    o_ref[...] = h.astype(o_ref.dtype)


def pack_popnet_params(params, d_in, d_out, weight_dtype=jnp.bfloat16):
    """Pack (w1,b1,...,w5,b5) into one zero-padded weight stack + one bias table.

    weights are (fan_in, fan_out) (transposed vs PyTorch's (out, in)); padded
    rows/cols are zero so padded lanes stay inert through ReLU.
    """
    fan_ins = [d_in, HIDDEN, HIDDEN, HIDDEN, HIDDEN]
    fan_outs = [HIDDEN, HIDDEN, HIDDEN, HIDDEN, d_out]
    fan_ins_pad = _fan_ins_padded(d_in)
    w_blocks, b_rows = [], []
    for l in range(N_LAYERS):
        w = jnp.asarray(params[2 * l], jnp.float32)
        b = jnp.asarray(params[2 * l + 1], jnp.float32).reshape(-1)
        wp = jnp.zeros((fan_ins_pad[l], LANE), jnp.float32)
        wp = wp.at[:fan_ins[l], :fan_outs[l]].set(w)
        bp = jnp.zeros((LANE,), jnp.float32).at[:fan_outs[l]].set(b)
        w_blocks.append(wp)
        b_rows.append(bp)
    packed_w = jnp.concatenate(w_blocks, axis=0).astype(weight_dtype)   # (sum fan_in_pad, 128)
    packed_b = jnp.stack(b_rows, axis=0)                                # (5, 128) f32
    return packed_w, packed_b


@functools.partial(jax.jit, static_argnames=("d_out", "tile_b"))
def popnet_forward(x, packed_w, packed_b, *, d_out, tile_b=512):
    """x: (batch, d_in) f32.  Returns (batch, d_out) f32."""
    batch, d_in = x.shape
    d_in_pad = _round_up(d_in, LANE)
    fan_ins_pad = _fan_ins_padded(d_in)
    row_offsets = [0]
    for f in fan_ins_pad:
        row_offsets.append(row_offsets[-1] + f)
    total_rows = row_offsets[-1]

    # Batch tile: multiple of 16 (bf16 sublane packing); don't over-tile tiny batches.
    tile = min(tile_b, _round_up(batch, 16))
    b_pad = _round_up(batch, tile)

    # Pad batch rows and input features with zeros; cast operand to bf16.
    x_p = jnp.zeros((b_pad, d_in_pad), jnp.bfloat16)
    x_p = x_p.at[:batch, :d_in].set(x.astype(jnp.bfloat16))

    kernel = functools.partial(popnet_kernel, row_offsets=tuple(row_offsets))
    out = pl.pallas_call(
        kernel,
        out_shape=jax.ShapeDtypeStruct((b_pad, LANE), jnp.float32),
        grid=(b_pad // tile,),
        in_specs=[
            pl.BlockSpec((tile, d_in_pad), lambda i: (i, 0)),       # batch-tiled input (double-buffered)
            pl.BlockSpec((total_rows, LANE), lambda i: (0, 0)),     # packed weights, VMEM-resident
            pl.BlockSpec((N_LAYERS, LANE), lambda i: (0, 0)),       # packed biases, VMEM-resident
        ],
        out_specs=pl.BlockSpec((tile, LANE), lambda i: (i, 0)),
        compiler_params=pltpu.CompilerParams(
            dimension_semantics=("parallel",)),                     # batch tiles across TCs on v7x
    )(x_p, packed_w, packed_b)
    return out[:batch, :d_out]


def init_popnet_params(key, d_in, d_out):
    """Deterministic init mimicking torch.nn.Linear (U(-1/sqrt(fan_in), 1/sqrt(fan_in)))."""
    dims = [(d_in, HIDDEN), (HIDDEN, HIDDEN), (HIDDEN, HIDDEN),
            (HIDDEN, HIDDEN), (HIDDEN, d_out)]
    params = []
    for fan_in, fan_out in dims:
        key, kw, kb = jax.random.split(key, 3)
        bound = 1.0 / jnp.sqrt(jnp.float32(fan_in))
        w = jax.random.uniform(kw, (fan_in, fan_out), jnp.float32, -bound, bound)
        b = jax.random.uniform(kb, (1, fan_out), jnp.float32, -bound, bound)
        params += [w, b]
    return tuple(params)


def popnet_reference(x, params):
    """Pure-f32 JAX reference."""
    h = x
    for l in range(N_LAYERS):
        h = h @ params[2 * l] + params[2 * l + 1].reshape(-1)
        if l < N_LAYERS - 1:
            h = jnp.maximum(h, 0.0)
    return h


def popnet_reference_bf16(x, params):
    """Reference emulating the kernel's precision: bf16 operands, f32 accumulate/bias/ReLU."""
    h = x
    for l in range(N_LAYERS):
        w = params[2 * l].astype(jnp.bfloat16).astype(jnp.float32)
        h_op = h.astype(jnp.bfloat16).astype(jnp.float32)
        h = h_op @ w + params[2 * l + 1].reshape(-1)
        if l < N_LAYERS - 1:
            h = jnp.maximum(h, 0.0)
    return h


if __name__ == "__main__":
    key = jax.random.PRNGKey(0)
    batch, d_in, d_out = 2, 32, 4

    key, kx = jax.random.split(key)
    x = jax.random.normal(kx, (batch, d_in), jnp.float32)
    params = init_popnet_params(key, d_in, d_out)
    packed_w, packed_b = pack_popnet_params(params, d_in, d_out)

    out = popnet_forward(x, packed_w, packed_b, d_out=d_out)
    jax.block_until_ready(out)
    assert out.shape == (batch, d_out)

    # Matches the bf16-operand / f32-accumulate math tightly, and the pure-f32
    # PyTorch-equivalent forward within bf16 quantization error.
    assert jnp.allclose(out, popnet_reference_bf16(x, params), atol=2e-3, rtol=2e-3)
    assert jnp.allclose(out, popnet_reference(x, params), atol=5e-2, rtol=5e-2)

    # Larger batch exercising the batch grid (multiple tiles + batch-row padding).
    key, kx2 = jax.random.split(key)
    x2 = jax.random.normal(kx2, (200, d_in), jnp.float32)
    out2 = popnet_forward(x2, packed_w, packed_b, d_out=d_out, tile_b=64)
    jax.block_until_ready(out2)
    assert out2.shape == (200, d_out)
    assert jnp.allclose(out2, popnet_reference_bf16(x2, params), atol=2e-3, rtol=2e-3)

    print("KERNEL_OK")
</pallas_src>

<mosaic_0001>
module attributes {stable_mosaic.version = 11 : i64} {
  func.func @popnet_kernel(%arg0: i32, %arg1: memref<16x128xbf16, #tpu.memory_space<vmem>>, %arg2: memref<640x128xbf16, #tpu.memory_space<vmem>>, %arg3: memref<5x128xf32, #tpu.memory_space<vmem>>, %arg4: memref<16x128xf32, #tpu.memory_space<vmem>>) attributes {dimension_semantics = [#tpu.dimension_semantics<parallel>], iteration_bounds = array<i64: 1>, scalar_prefetch = 0 : i64, scratch_operands = 0 : i64, tpu.core_type = #tpu.core_type<tc>, window_params = [{transform_indices = @transform_0, window_bounds = array<i64: 16, 128>}, {pipeline_mode = #tpu.pipeline_mode<synchronous>, transform_indices = @transform_1, window_bounds = array<i64: 640, 128>}, {pipeline_mode = #tpu.pipeline_mode<synchronous>, transform_indices = @transform_2, window_bounds = array<i64: 5, 128>}, {transform_indices = @transform_3, window_bounds = array<i64: 16, 128>}]} {
    %c0 = arith.constant 0 : index
    %c0_0 = arith.constant 0 : index
    %0 = vector.load %arg1[%c0, %c0_0] : memref<16x128xbf16, #tpu.memory_space<vmem>>, vector<16x128xbf16>
    %c0_1 = arith.constant 0 : index
    %c0_2 = arith.constant 0 : index
    %1 = vector.load %arg2[%c0_1, %c0_2] : memref<640x128xbf16, #tpu.memory_space<vmem>>, vector<128x128xbf16>
    %cst = arith.constant dense<0.000000e+00> : vector<16x128xf32>
    %2 = tpu.matmul %0, %1, %cst {dimension_numbers = #tpu.dot_dimension_numbers<[1], [0], [0], [1], [0, 0, 1, 1], [], []>} : vector<16x128xbf16>, vector<128x128xbf16>, vector<16x128xf32> -> vector<16x128xf32>
    %c0_3 = arith.constant 0 : index
    %c0_4 = arith.constant 0 : index
    %3 = vector.load %arg3[%c0_3, %c0_4] : memref<5x128xf32, #tpu.memory_space<vmem>>, vector<1x128xf32>
    %4 = vector.broadcast %3 : vector<1x128xf32> to vector<16x128xf32>
    %5 = arith.addf %2, %4 : vector<16x128xf32>
    %cst_5 = arith.constant 0.000000e+00 : f32
    %6 = vector.broadcast %cst_5 : f32 to vector<16x128xf32>
    %7 = arith.maximumf %5, %6 : vector<16x128xf32>
    %8 = arith.truncf %7 : vector<16x128xf32> to vector<16x128xbf16>
    %c128 = arith.constant 128 : index
    %c0_6 = arith.constant 0 : index
    %9 = vector.load %arg2[%c128, %c0_6] : memref<640x128xbf16, #tpu.memory_space<vmem>>, vector<128x128xbf16>
    %cst_7 = arith.constant dense<0.000000e+00> : vector<16x128xf32>
    %10 = tpu.matmul %8, %9, %cst_7 {dimension_numbers = #tpu.dot_dimension_numbers<[1], [0], [0], [1], [0, 0, 1, 1], [], []>} : vector<16x128xbf16>, vector<128x128xbf16>, vector<16x128xf32> -> vector<16x128xf32>
    %c1 = arith.constant 1 : index
    %c0_8 = arith.constant 0 : index
    %11 = vector.load %arg3[%c1, %c0_8] : memref<5x128xf32, #tpu.memory_space<vmem>>, vector<1x128xf32>
    %12 = vector.broadcast %11 : vector<1x128xf32> to vector<16x128xf32>
    %13 = arith.addf %10, %12 : vector<16x128xf32>
    %cst_9 = arith.constant 0.000000e+00 : f32
    %14 = vector.broadcast %cst_9 : f32 to vector<16x128xf32>
    %15 = arith.maximumf %13, %14 : vector<16x128xf32>
    %16 = arith.truncf %15 : vector<16x128xf32> to vector<16x128xbf16>
    %c256 = arith.constant 256 : index
    %c0_10 = arith.constant 0 : index
    %17 = vector.load %arg2[%c256, %c0_10] : memref<640x128xbf16, #tpu.memory_space<vmem>>, vector<128x128xbf16>
    %cst_11 = arith.constant dense<0.000000e+00> : vector<16x128xf32>
    %18 = tpu.matmul %16, %17, %cst_11 {dimension_numbers = #tpu.dot_dimension_numbers<[1], [0], [0], [1], [0, 0, 1, 1], [], []>} : vector<16x128xbf16>, vector<128x128xbf16>, vector<16x128xf32> -> vector<16x128xf32>
    %c2 = arith.constant 2 : index
    %c0_12 = arith.constant 0 : index
    %19 = vector.load %arg3[%c2, %c0_12] : memref<5x128xf32, #tpu.memory_space<vmem>>, vector<1x128xf32>
    %20 = vector.broadcast %19 : vector<1x128xf32> to vector<16x128xf32>
    %21 = arith.addf %18, %20 : vector<16x128xf32>
    %cst_13 = arith.constant 0.000000e+00 : f32
    %22 = vector.broadcast %cst_13 : f32 to vector<16x128xf32>
    %23 = arith.maximumf %21, %22 : vector<16x128xf32>
    %24 = arith.truncf %23 : vector<16x128xf32> to vector<16x128xbf16>
    %c384 = arith.constant 384 : index
    %c0_14 = arith.constant 0 : index
    %25 = vector.load %arg2[%c384, %c0_14] : memref<640x128xbf16, #tpu.memory_space<vmem>>, vector<128x128xbf16>
    %cst_15 = arith.constant dense<0.000000e+00> : vector<16x128xf32>
    %26 = tpu.matmul %24, %25, %cst_15 {dimension_numbers = #tpu.dot_dimension_numbers<[1], [0], [0], [1], [0, 0, 1, 1], [], []>} : vector<16x128xbf16>, vector<128x128xbf16>, vector<16x128xf32> -> vector<16x128xf32>
    %c3 = arith.constant 3 : index
    %c0_16 = arith.constant 0 : index
    %27 = vector.load %arg3[%c3, %c0_16] : memref<5x128xf32, #tpu.memory_space<vmem>>, vector<1x128xf32>
    %28 = vector.broadcast %27 : vector<1x128xf32> to vector<16x128xf32>
    %29 = arith.addf %26, %28 : vector<16x128xf32>
    %cst_17 = arith.constant 0.000000e+00 : f32
    %30 = vector.broadcast %cst_17 : f32 to vector<16x128xf32>
    %31 = arith.maximumf %29, %30 : vector<16x128xf32>
    %32 = arith.truncf %31 : vector<16x128xf32> to vector<16x128xbf16>
    %c512 = arith.constant 512 : index
    %c0_18 = arith.constant 0 : index
    %33 = vector.load %arg2[%c512, %c0_18] : memref<640x128xbf16, #tpu.memory_space<vmem>>, vector<128x128xbf16>
    %cst_19 = arith.constant dense<0.000000e+00> : vector<16x128xf32>
    %34 = tpu.matmul %32, %33, %cst_19 {dimension_numbers = #tpu.dot_dimension_numbers<[1], [0], [0], [1], [0, 0, 1, 1], [], []>} : vector<16x128xbf16>, vector<128x128xbf16>, vector<16x128xf32> -> vector<16x128xf32>
    %c4 = arith.constant 4 : index
    %c0_20 = arith.constant 0 : index
    %35 = vector.load %arg3[%c4, %c0_20] : memref<5x128xf32, #tpu.memory_space<vmem>>, vector<1x128xf32>
    %36 = vector.broadcast %35 : vector<1x128xf32> to vector<16x128xf32>
    %37 = arith.addf %34, %36 : vector<16x128xf32>
    %c0_21 = arith.constant 0 : index
    %c0_22 = arith.constant 0 : index
    %38 = vector.load %arg4[%c0_21, %c0_22] : memref<16x128xf32, #tpu.memory_space<vmem>>, vector<16x128xf32>
    tpu.vector_store %arg4[%c0_21, %c0_22], %37 {strides = array<i32>} : memref<16x128xf32, #tpu.memory_space<vmem>>, vector<16x128xf32>,
    return
  }
  func.func @transform_0(%arg0: i32) -> (i32, i32) {
    %c0_i32 = arith.constant 0 : i32
    %c0_i32_0 = arith.constant 0 : i32
    return %arg0, %c0_i32 : i32, i32
  }
  func.func @transform_1(%arg0: i32) -> (i32, i32) {
    %c0_i32 = arith.constant 0 : i32
    %c0_i32_0 = arith.constant 0 : i32
    %c0_i32_1 = arith.constant 0 : i32
    return %c0_i32, %c0_i32_0 : i32, i32
  }
  func.func @transform_2(%arg0: i32) -> (i32, i32) {
    %c0_i32 = arith.constant 0 : i32
    %c0_i32_0 = arith.constant 0 : i32
    %c0_i32_1 = arith.constant 0 : i32
    return %c0_i32, %c0_i32_0 : i32, i32
  }
  func.func @transform_3(%arg0: i32) -> (i32, i32) {
    %c0_i32 = arith.constant 0 : i32
    %c0_i32_0 = arith.constant 0 : i32
    return %arg0, %c0_i32 : i32, i32
  }
}

</mosaic_0001>

<llo_original>
// kernel: popnet_forward.1
$region0: #{popnet_forward.1}
  #allocation0 [shape = 'u32[]', space=smem, size = 0x4, offset = 0x4, fixed_abs, tag = 'smem constant byte address 0x4 - core index']
  #allocation1 [shape = 'u32[144,128]{1,0:T(1,128)}', space=vmem, size = 0x12000, scoped, tag = 'internal scratch']
  %s0 = inlined_call_operand.vmem [shape: bf16[16,128], index: 0, kind: input, shape index: {}]
  %s1 = inlined_call_operand.hbm [shape: bf16[640,128], index: 1, kind: input, shape index: {}]
  %s2 = inlined_call_operand.vmem [shape: f32[5,128], index: 2, kind: input, shape index: {}]
  %s3 = inlined_call_operand.vmem [shape: f32[16,128], index: 3, kind: output, shape index: {}]
  %s4 = sld [smem:[#allocation0]]
  $region26: #{popnet_forward.1} parent=0
    _
  %s6 = ssub.s32 1, %s4
  %s7 = scalar_select 0, %s6, %s4
  $region1: #{popnet_forward.1} parent=0
    #allocation2 [shape = 'u8[163840]{0}', space=vmem, size = 0x28000, scoped, tag = 'input window, operand 1, single buffered']
    #allocation3 [shape = 's32[1]{0}', space=sflag, size = 0x4, scoped, tag = 'scoped memory for popnet_forward.1']
    %8 = vsyncpa [#allocation3], 0
    // Predicated region
    $region2: #{popnet_forward.1} parent=1 // pred_check
      _
    $region3: #{popnet_forward.1} parent=1 // pred_check_branch
      %10 = sbr.rel (0) target = $region5
    $region4: #{popnet_forward.1} parent=1 // pred_region
      _
    $region5: #{popnet_forward.1} parent=1 // pred_fallthru
      _
    // Predicated region
    $region6: #{popnet_forward.1} parent=1 // pred_check
      _
    $region7: #{popnet_forward.1} parent=1 // pred_check_branch
      %12 = sbr.rel (0) target = $region9
    $region8: #{popnet_forward.1} parent=1 // pred_region
      %s14 = ssub.s32 5120, 5120
      %15 = vsyncadd [#allocation3], %s14
      %s16 = sshll.u32 [#allocation2], 4
      %s17 = int_to_ptr.vmem [resolvable:$true] %s16
      %22 = dma.hbm_to_vmem [thread:$0]  %s1, 5120, %s17, [#allocation3], 64, 64, 4
    $region9: #{popnet_forward.1} parent=1 // pred_fallthru
      _
    // Predicated region
    $region10: #{popnet_forward.1} parent=1 // pred_check
      _
    $region11: #{popnet_forward.1} parent=1 // pred_check_branch
      %24 = sbr.rel (0) target = $region13
    $region12: #{popnet_forward.1} parent=1 // pred_region
      _
    $region13: #{popnet_forward.1} parent=1 // pred_fallthru
      _
    // Predicated region
    $region14: #{popnet_forward.1} parent=1 // pred_check
      _
    $region15: #{popnet_forward.1} parent=1 // pred_check_branch
      %26 = sbr.rel (0) target = $region17
    $region16: #{popnet_forward.1} parent=1 // pred_region
      %27 = dma.done [#allocation3], 5120
    $region17: #{popnet_forward.1} parent=1 // pred_fallthru
      _
    %v29 = vld [vmem:[%s0] sm:$0xf]
    %v30 = vld [vmem:[%s0 + $0x4] sm:$0xf]
    %v31 = vld [vmem:[#allocation2] sm:$0xf]
    %v32 = vld [vmem:[#allocation2 + $0x4] sm:$0xf]
    %v33 = vld [vmem:[#allocation2 + $0x8] sm:$0xf]
    %v34 = vld [vmem:[#allocation2 + $0xc] sm:$0xf]
    %v35 = vld [vmem:[#allocation2 + $0x10] sm:$0xf]
    %v36 = vld [vmem:[#allocation2 + $0x14] sm:$0xf]
    %v37 = vld [vmem:[#allocation2 + $0x18] sm:$0xf]
    %v38 = vld [vmem:[#allocation2 + $0x1c] sm:$0xf]
    %v39 = vld [vmem:[#allocation2 + $0x20] sm:$0xf]
    %v40 = vld [vmem:[#allocation2 + $0x24] sm:$0xf]
    %v41 = vld [vmem:[#allocation2 + $0x28] sm:$0xf]
    %v42 = vld [vmem:[#allocation2 + $0x2c] sm:$0xf]
    %v43 = vld [vmem:[#allocation2 + $0x30] sm:$0xf]
    %v44 = vld [vmem:[#allocation2 + $0x34] sm:$0xf]
    %v45 = vld [vmem:[#allocation2 + $0x38] sm:$0xf]
    %v46 = vld [vmem:[#allocation2 + $0x3c] sm:$0xf]
    %v47 = vld [vmem:[%s2] sm:$0x1]
    %v48 = vlaneseq
    %v49 = vshrl.u32 %v48, 7
    %v50 = vsub.s32 0, %v49
    %v51 = vrot.slane %v47, %v50
    %v54 = vunpack.c.l.b16 %v29
    %v55 = vunpack.c.l.b16 %v30
    %v56 = vpack.c.b16 %v55, %v54
    %v74 = vunpack.c.l.b16 %v31
    %v75 = vunpack.c.l.b16 %v32
    %v76 = vunpack.c.l.b16 %v33
    %v77 = vunpack.c.l.b16 %v34
    %v78 = vunpack.c.l.b16 %v35
    %v79 = vunpack.c.l.b16 %v36
    %v80 = vunpack.c.l.b16 %v37
    %v81 = vunpack.c.l.b16 %v38
    %v82 = vunpack.c.l.b16 %v39
    %v83 = vunpack.c.l.b16 %v40
    %v84 = vunpack.c.l.b16 %v41
    %v85 = vunpack.c.l.b16 %v42
    %v86 = vunpack.c.l.b16 %v43
    %v87 = vunpack.c.l.b16 %v44
    %v88 = vunpack.c.l.b16 %v45
    %v89 = vunpack.c.l.b16 %v46
    %v90 = vpack.c.b16 %v75, %v74
    %v91 = vpack.c.b16 %v77, %v76
    %v92 = vpack.c.b16 %v79, %v78
    %v93 = vpack.c.b16 %v81, %v80
    %v94 = vpack.c.b16 %v83, %v82
    %v95 = vpack.c.b16 %v85, %v84
    %v96 = vpack.c.b16 %v87, %v86
    %v97 = vpack.c.b16 %v89, %v88
    %106 = vmatprep.subr.bf16.mxu0 0
    %107 = vmatpush1.bf16.msra.mxu0 %v90
    %108 = vmatprep.subr.bf16.mxu0 0
    %109 = vmatpush1.bf16.msra.mxu0 %v91
    %110 = vmatprep.subr.bf16.mxu0 0
    %111 = vmatpush1.bf16.msra.mxu0 %v92
    %112 = vmatprep.subr.bf16.mxu0 0
    %113 = vmatpush1.bf16.msra.mxu0 %v93
    %114 = vmatprep.subr.bf16.mxu0 0
    %115 = vmatpush1.bf16.msra.mxu0 %v94
    %116 = vmatprep.subr.bf16.mxu0 0
    %117 = vmatpush1.bf16.msra.mxu0 %v95
    %118 = vmatprep.subr.bf16.mxu0 0
    %119 = vmatpush1.bf16.msra.mxu0 %v96
    %120 = vmatprep.subr.bf16.mxu0 0
    %121 = vmatpush1.bf16.msra.mxu0 %v97
    %122 = vmatprep.subr.bf16.mxu0 0
    %123 = vmatpush1.bf16.msra.mxu0 0
    %124 = vmatprep.subr.bf16.mxu0 0
    %125 = vmatpush1.bf16.msra.mxu0 0
    %126 = vmatprep.subr.bf16.mxu0 0
    %127 = vmatpush1.bf16.msra.mxu0 0
    %128 = vmatprep.subr.bf16.mxu0 0
    %129 = vmatpush1.bf16.msra.mxu0 0
    %130 = vmatprep.subr.bf16.mxu0 0
    %131 = vmatpush1.bf16.msra.mxu0 0
    %132 = vmatprep.subr.bf16.mxu0 0
    %133 = vmatpush1.bf16.msra.mxu0 0
    %134 = vmatprep.subr.bf16.mxu0 0
    %135 = vmatpush1.bf16.msra.mxu0 0
    %136 = vmatprep.subr.bf16.mxu0 0
    %137 = vmatpush1.bf16.msra.mxu0 0
    %138 = vmatprep.mubr.bf16.mxu0 0
    %139 = vmatmul.mubr.bf16.gmra.mrb[0].mxu0 %v56
    %v140 = vpop.f32.mrb[0].mxu0
    %v141 = vadd.f32 %v51, %v140
    %v142 = vpop.f32.mrb[0].mxu0
    %v143 = vpop.f32.mrb[0].mxu0
    %v144 = vadd.f32 %v51, %v143
    %v145 = vpop.f32.mrb[0].mxu0
    %146 = vdwg.mxu0
    %v147 = vmax.f32 %v141, 0.0
    %v148 = vmax.f32 %v144, 0.0
    %v149 = vpack.c.bf16 %v148, %v147
    %v150 = vld [vmem:[#allocation2 + $0x40] sm:$0xf]
    %v151 = vld [vmem:[#allocation2 + $0x44] sm:$0xf]
    %v152 = vld [vmem:[#allocation2 + $0x48] sm:$0xf]
    %v153 = vld [vmem:[#allocation2 + $0x4c] sm:$0xf]
    %v154 = vld [vmem:[#allocation2 + $0x50] sm:$0xf]
    %v155 = vld [vmem:[#allocation2 + $0x54] sm:$0xf]
    %v156 = vld [vmem:[#allocation2 + $0x58] sm:$0xf]
    %v157 = vld [vmem:[#allocation2 + $0x5c] sm:$0xf]
    %v158 = vld [vmem:[#allocation2 + $0x60] sm:$0xf]
    %v159 = vld [vmem:[#allocation2 + $0x64] sm:$0xf]
    %v160 = vld [vmem:[#allocation2 + $0x68] sm:$0xf]
    %v161 = vld [vmem:[#allocation2 + $0x6c] sm:$0xf]
    %v162 = vld [vmem:[#allocation2 + $0x70] sm:$0xf]
    %v163 = vld [vmem:[#allocation2 + $0x74] sm:$0xf]
    %v164 = vld [vmem:[#allocation2 + $0x78] sm:$0xf]
    %v165 = vld [vmem:[#allocation2 + $0x7c] sm:$0xf]
    %v166 = vld [vmem:[%s2 + $0x1] sm:$0x1]
    %v167 = vlaneseq
    %v168 = vshrl.u32 %v167, 7
    %v169 = vsub.s32 0, %v168
    %v170 = vrot.slane %v166, %v169
    %v187 = vunpack.c.l.b16 %v150
    %v188 = vunpack.c.l.b16 %v151
    %v189 = vunpack.c.l.b16 %v152
    %v190 = vunpack.c.l.b16 %v153
    %v191 = vunpack.c.l.b16 %v154
    %v192 = vunpack.c.l.b16 %v155
    %v193 = vunpack.c.l.b16 %v156
    %v194 = vunpack.c.l.b16 %v157
    %v195 = vunpack.c.l.b16 %v158
    %v196 = vunpack.c.l.b16 %v159
    %v197 = vunpack.c.l.b16 %v160
    %v198 = vunpack.c.l.b16 %v161
    %v199 = vunpack.c.l.b16 %v162
    %v200 = vunpack.c.l.b16 %v163
    %v201 = vunpack.c.l.b16 %v164
    %v202 = vunpack.c.l.b16 %v165
    %v203 = vpack.c.b16 %v188, %v187
    %v204 = vpack.c.b16 %v190, %v189
    %v205 = vpack.c.b16 %v192, %v191
    %v206 = vpack.c.b16 %v194, %v193
    %v207 = vpack.c.b16 %v196, %v195
    %v208 = vpack.c.b16 %v198, %v197
    %v209 = vpack.c.b16 %v200, %v199
    %v210 = vpack.c.b16 %v202, %v201
    %219 = vmatprep.subr.bf16.mxu0 0
    %220 = vmatpush1.bf16.msra.mxu0 %v203
    %221 = vmatprep.subr.bf16.mxu0 0
    %222 = vmatpush1.bf16.msra.mxu0 %v204
    %223 = vmatprep.subr.bf16.mxu0 0
    %224 = vmatpush1.bf16.msra.mxu0 %v205
    %225 = vmatprep.subr.bf16.mxu0 0
    %226 = vmatpush1.bf16.msra.mxu0 %v206
    %227 = vmatprep.subr.bf16.mxu0 0
    %228 = vmatpush1.bf16.msra.mxu0 %v207
    %229 = vmatprep.subr.bf16.mxu0 0
    %230 = vmatpush1.bf16.msra.mxu0 %v208
    %231 = vmatprep.subr.bf16.mxu0 0
    %232 = vmatpush1.bf16.msra.mxu0 %v209
    %233 = vmatprep.subr.bf16.mxu0 0
    %234 = vmatpush1.bf16.msra.mxu0 %v210
    %235 = vmatprep.subr.bf16.mxu0 0
    %236 = vmatpush1.bf16.msra.mxu0 0
    %237 = vmatprep.subr.bf16.mxu0 0
    %238 = vmatpush1.bf16.msra.mxu0 0
    %239 = vmatprep.subr.bf16.mxu0 0
    %240 = vmatpush1.bf16.msra.mxu0 0
    %241 = vmatprep.subr.bf16.mxu0 0
    %242 = vmatpush1.bf16.msra.mxu0 0
    %243 = vmatprep.subr.bf16.mxu0 0
    %244 = vmatpush1.bf16.msra.mxu0 0
    %245 = vmatprep.subr.bf16.mxu0 0
    %246 = vmatpush1.bf16.msra.mxu0 0
    %247 = vmatprep.subr.bf16.mxu0 0
    %248 = vmatpush1.bf16.msra.mxu0 0
    %249 = vmatprep.subr.bf16.mxu0 0
    %250 = vmatpush1.bf16.msra.mxu0 0
    %251 = vmatprep.mubr.bf16.mxu0 0
    %252 = vmatmul.mubr.bf16.gmra.mrb[0].mxu0 %v149
    %v253 = vpop.f32.mrb[0].mxu0
    %v254 = vadd.f32 %v170, %v253
    %v255 = vpop.f32.mrb[0].mxu0
    %v256 = vpop.f32.mrb[0].mxu0
    %v257 = vadd.f32 %v170, %v256
    %v258 = vpop.f32.mrb[0].mxu0
    %259 = vdwg.mxu0
    %v260 = vmax.f32 %v254, 0.0
    %v261 = vmax.f32 %v257, 0.0
    %v262 = vpack.c.bf16 %v261, %v260
    %v263 = vld [vmem:[#allocation2 + $0x80] sm:$0xf]
    %v264 = vld [vmem:[#allocation2 + $0x84] sm:$0xf]
    %v265 = vld [vmem:[#allocation2 + $0x88] sm:$0xf]
    %v266 = vld [vmem:[#allocation2 + $0x8c] sm:$0xf]
    %v267 = vld [vmem:[#allocation2 + $0x90] sm:$0xf]
    %v268 = vld [vmem:[#allocation2 + $0x94] sm:$0xf]
    %v269 = vld [vmem:[#allocation2 + $0x98] sm:$0xf]
    %v270 = vld [vmem:[#allocation2 + $0x9c] sm:$0xf]
    %v271 = vld [vmem:[#allocation2 + $0xa0] sm:$0xf]
    %v272 = vld [vmem:[#allocation2 + $0xa4] sm:$0xf]
    %v273 = vld [vmem:[#allocation2 + $0xa8] sm:$0xf]
    %v274 = vld [vmem:[#allocation2 + $0xac] sm:$0xf]
    %v275 = vld [vmem:[#allocation2 + $0xb0] sm:$0xf]
    %v276 = vld [vmem:[#allocation2 + $0xb4] sm:$0xf]
    %v277 = vld [vmem:[#allocation2 + $0xb8] sm:$0xf]
    %v278 = vld [vmem:[#allocation2 + $0xbc] sm:$0xf]
    %v279 = vld [vmem:[%s2 + $0x2] sm:$0x1]
    %v280 = vlaneseq
    %v281 = vshrl.u32 %v280, 7
    %v282 = vsub.s32 0, %v281
    %v283 = vrot.slane %v279, %v282
    %v300 = vunpack.c.l.b16 %v263
    %v301 = vunpack.c.l.b16 %v264
    %v302 = vunpack.c.l.b16 %v265
    %v303 = vunpack.c.l.b16 %v266
    %v304 = vunpack.c.l.b16 %v267
    %v305 = vunpack.c.l.b16 %v268
    %v306 = vunpack.c.l.b16 %v269
    %v307 = vunpack.c.l.b16 %v270
    %v308 = vunpack.c.l.b16 %v271
    %v309 = vunpack.c.l.b16 %v272
    %v310 = vunpack.c.l.b16 %v273
    %v311 = vunpack.c.l.b16 %v274
    %v312 = vunpack.c.l.b16 %v275
    %v313 = vunpack.c.l.b16 %v276
    %v314 = vunpack.c.l.b16 %v277
    %v315 = vunpack.c.l.b16 %v278
    %v316 = vpack.c.b16 %v301, %v300
    %v317 = vpack.c.b16 %v303, %v302
    %v318 = vpack.c.b16 %v305, %v304
    %v319 = vpack.c.b16 %v307, %v306
    %v320 = vpack.c.b16 %v309, %v308
    %v321 = vpack.c.b16 %v311, %v310
    %v322 = vpack.c.b16 %v313, %v312
    %v323 = vpack.c.b16 %v315, %v314
    %332 = vmatprep.subr.bf16.mxu0 0
    %333 = vmatpush1.bf16.msra.mxu0 %v316
    %334 = vmatprep.subr.bf16.mxu0 0
    %335 = vmatpush1.bf16.msra.mxu0 %v317
    %336 = vmatprep.subr.bf16.mxu0 0
    %337 = vmatpush1.bf16.msra.mxu0 %v318
    %338 = vmatprep.subr.bf16.mxu0 0
    %339 = vmatpush1.bf16.msra.mxu0 %v319
    %340 = vmatprep.subr.bf16.mxu0 0
    %341 = vmatpush1.bf16.msra.mxu0 %v320
    %342 = vmatprep.subr.bf16.mxu0 0
    %343 = vmatpush1.bf16.msra.mxu0 %v321
    %344 = vmatprep.subr.bf16.mxu0 0
    %345 = vmatpush1.bf16.msra.mxu0 %v322
    %346 = vmatprep.subr.bf16.mxu0 0
    %347 = vmatpush1.bf16.msra.mxu0 %v323
    %348 = vmatprep.subr.bf16.mxu0 0
    %349 = vmatpush1.bf16.msra.mxu0 0
    %350 = vmatprep.subr.bf16.mxu0 0
    %351 = vmatpush1.bf16.msra.mxu0 0
    %352 = vmatprep.subr.bf16.mxu0 0
    %353 = vmatpush1.bf16.msra.mxu0 0
    %354 = vmatprep.subr.bf16.mxu0 0
    %355 = vmatpush1.bf16.msra.mxu0 0
    %356 = vmatprep.subr.bf16.mxu0 0
    %357 = vmatpush1.bf16.msra.mxu0 0
    %358 = vmatprep.subr.bf16.mxu0 0
    %359 = vmatpush1.bf16.msra.mxu0 0
    %360 = vmatprep.subr.bf16.mxu0 0
    %361 = vmatpush1.bf16.msra.mxu0 0
    %362 = vmatprep.subr.bf16.mxu0 0
    %363 = vmatpush1.bf16.msra.mxu0 0
    %364 = vmatprep.mubr.bf16.mxu0 0
    %365 = vmatmul.mubr.bf16.gmra.mrb[0].mxu0 %v262
    %v366 = vpop.f32.mrb[0].mxu0
    %v367 = vadd.f32 %v283, %v366
    %v368 = vpop.f32.mrb[0].mxu0
    %v369 = vpop.f32.mrb[0].mxu0
    %v370 = vadd.f32 %v283, %v369
    %v371 = vpop.f32.mrb[0].mxu0
    %372 = vdwg.mxu0
    %v373 = vmax.f32 %v367, 0.0
    %v374 = vmax.f32 %v370, 0.0
    %v375 = vpack.c.bf16 %v374, %v373
    %v376 = vld [vmem:[#allocation2 + $0xc0] sm:$0xf]
    %v377 = vld [vmem:[#allocation2 + $0xc4] sm:$0xf]
    %v378 = vld [vmem:[#allocation2 + $0xc8] sm:$0xf]
    %v379 = vld [vmem:[#allocation2 + $0xcc] sm:$0xf]
    %v380 = vld [vmem:[#allocation2 + $0xd0] sm:$0xf]
    %v381 = vld [vmem:[#allocation2 + $0xd4] sm:$0xf]
    %v382 = vld [vmem:[#allocation2 + $0xd8] sm:$0xf]
    %v383 = vld [vmem:[#allocation2 + $0xdc] sm:$0xf]
    %v384 = vld [vmem:[#allocation2 + $0xe0] sm:$0xf]
    %v385 = vld [vmem:[#allocation2 + $0xe4] sm:$0xf]
    %v386 = vld [vmem:[#allocation2 + $0xe8] sm:$0xf]
    %v387 = vld [vmem:[#allocation2 + $0xec] sm:$0xf]
    %v388 = vld [vmem:[#allocation2 + $0xf0] sm:$0xf]
    %v389 = vld [vmem:[#allocation2 + $0xf4] sm:$0xf]
    %v390 = vld [vmem:[#allocation2 + $0xf8] sm:$0xf]
    %v391 = vld [vmem:[#allocation2 + $0xfc] sm:$0xf]
    %v392 = vld [vmem:[%s2 + $0x3] sm:$0x1]
    %v393 = vlaneseq
    %v394 = vshrl.u32 %v393, 7
    %v395 = vsub.s32 0, %v394
    %v396 = vrot.slane %v392, %v395
    %v413 = vunpack.c.l.b16 %v376
    %v414 = vunpack.c.l.b16 %v377
    %v415 = vunpack.c.l.b16 %v378
    %v416 = vunpack.c.l.b16 %v379
    %v417 = vunpack.c.l.b16 %v380
    %v418 = vunpack.c.l.b16 %v381
    %v419 = vunpack.c.l.b16 %v382
    %v420 = vunpack.c.l.b16 %v383
    %v421 = vunpack.c.l.b16 %v384
    %v422 = vunpack.c.l.b16 %v385
    %v423 = vunpack.c.l.b16 %v386
    %v424 = vunpack.c.l.b16 %v387
    %v425 = vunpack.c.l.b16 %v388
    %v426 = vunpack.c.l.b16 %v389
    %v427 = vunpack.c.l.b16 %v390
    %v428 = vunpack.c.l.b16 %v391
    %v429 = vpack.c.b16 %v414, %v413
    %v430 = vpack.c.b16 %v416, %v415
    %v431 = vpack.c.b16 %v418, %v417
    %v432 = vpack.c.b16 %v420, %v419
    %v433 = vpack.c.b16 %v422, %v421
    %v434 = vpack.c.b16 %v424, %v423
    %v435 = vpack.c.b16 %v426, %v425
    %v436 = vpack.c.b16 %v428, %v427
    %445 = vmatprep.subr.bf16.mxu0 0
    %446 = vmatpush1.bf16.msra.mxu0 %v429
    %447 = vmatprep.subr.bf16.mxu0 0
    %448 = vmatpush1.bf16.msra.mxu0 %v430
    %449 = vmatprep.subr.bf16.mxu0 0
    %450 = vmatpush1.bf16.msra.mxu0 %v431
    %451 = vmatprep.subr.bf16.mxu0 0
    %452 = vmatpush1.bf16.msra.mxu0 %v432
    %453 = vmatprep.subr.bf16.mxu0 0
    %454 = vmatpush1.bf16.msra.mxu0 %v433
    %455 = vmatprep.subr.bf16.mxu0 0
    %456 = vmatpush1.bf16.msra.mxu0 %v434
    %457 = vmatprep.subr.bf16.mxu0 0
    %458 = vmatpush1.bf16.msra.mxu0 %v435
    %459 = vmatprep.subr.bf16.mxu0 0
    %460 = vmatpush1.bf16.msra.mxu0 %v436
    %461 = vmatprep.subr.bf16.mxu0 0
    %462 = vmatpush1.bf16.msra.mxu0 0
    %463 = vmatprep.subr.bf16.mxu0 0
    %464 = vmatpush1.bf16.msra.mxu0 0
    %465 = vmatprep.subr.bf16.mxu0 0
    %466 = vmatpush1.bf16.msra.mxu0 0
    %467 = vmatprep.subr.bf16.mxu0 0
    %468 = vmatpush1.bf16.msra.mxu0 0
    %469 = vmatprep.subr.bf16.mxu0 0
    %470 = vmatpush1.bf16.msra.mxu0 0
    %471 = vmatprep.subr.bf16.mxu0 0
    %472 = vmatpush1.bf16.msra.mxu0 0
    %473 = vmatprep.subr.bf16.mxu0 0
    %474 = vmatpush1.bf16.msra.mxu0 0
    %475 = vmatprep.subr.bf16.mxu0 0
    %476 = vmatpush1.bf16.msra.mxu0 0
    %477 = vmatprep.mubr.bf16.mxu0 0
    %478 = vmatmul.mubr.bf16.gmra.mrb[0].mxu0 %v375
    %v479 = vpop.f32.mrb[0].mxu0
    %v480 = vadd.f32 %v396, %v479
    %v481 = vpop.f32.mrb[0].mxu0
    %v482 = vpop.f32.mrb[0].mxu0
    %v483 = vadd.f32 %v396, %v482
    %v484 = vpop.f32.mrb[0].mxu0
    %485 = vdwg.mxu0
    %v486 = vmax.f32 %v480, 0.0
    %v487 = vmax.f32 %v483, 0.0
    %v488 = vpack.c.bf16 %v487, %v486
    %v489 = vld [vmem:[#allocation2 + $0x100] sm:$0xf]
    %v490 = vld [vmem:[#allocation2 + $0x104] sm:$0xf]
    %v491 = vld [vmem:[#allocation2 + $0x108] sm:$0xf]
    %v492 = vld [vmem:[#allocation2 + $0x10c] sm:$0xf]
    %v493 = vld [vmem:[#allocation2 + $0x110] sm:$0xf]
    %v494 = vld [vmem:[#allocation2 + $0x114] sm:$0xf]
    %v495 = vld [vmem:[#allocation2 + $0x118] sm:$0xf]
    %v496 = vld [vmem:[#allocation2 + $0x11c] sm:$0xf]
    %v497 = vld [vmem:[#allocation2 + $0x120] sm:$0xf]
    %v498 = vld [vmem:[#allocation2 + $0x124] sm:$0xf]
    %v499 = vld [vmem:[#allocation2 + $0x128] sm:$0xf]
    %v500 = vld [vmem:[#allocation2 + $0x12c] sm:$0xf]
    %v501 = vld [vmem:[#allocation2 + $0x130] sm:$0xf]
    %v502 = vld [vmem:[#allocation2 + $0x134] sm:$0xf]
    %v503 = vld [vmem:[#allocation2 + $0x138] sm:$0xf]
    %v504 = vld [vmem:[#allocation2 + $0x13c] sm:$0xf]
    %v505 = vld [vmem:[%s2 + $0x4] sm:$0x1]
    %v506 = vlaneseq
    %v507 = vshrl.u32 %v506, 7
    %v508 = vsub.s32 0, %v507
    %v509 = vrot.slane %v505, %v508
    %v526 = vunpack.c.l.b16 %v489
    %v527 = vunpack.c.l.b16 %v490
    %v528 = vunpack.c.l.b16 %v491
    %v529 = vunpack.c.l.b16 %v492
    %v530 = vunpack.c.l.b16 %v493
    %v531 = vunpack.c.l.b16 %v494
    %v532 = vunpack.c.l.b16 %v495
    %v533 = vunpack.c.l.b16 %v496
    %v534 = vunpack.c.l.b16 %v497
    %v535 = vunpack.c.l.b16 %v498
    %v536 = vunpack.c.l.b16 %v499
    %v537 = vunpack.c.l.b16 %v500
    %v538 = vunpack.c.l.b16 %v501
    %v539 = vunpack.c.l.b16 %v502
    %v540 = vunpack.c.l.b16 %v503
    %v541 = vunpack.c.l.b16 %v504
    %v542 = vpack.c.b16 %v527, %v526
    %v543 = vpack.c.b16 %v529, %v528
    %v544 = vpack.c.b16 %v531, %v530
    %v545 = vpack.c.b16 %v533, %v532
    %v546 = vpack.c.b16 %v535, %v534
    %v547 = vpack.c.b16 %v537, %v536
    %v548 = vpack.c.b16 %v539, %v538
    %v549 = vpack.c.b16 %v541, %v540
    %558 = vmatprep.subr.bf16.mxu0 0
    %559 = vmatpush1.bf16.msra.mxu0 %v542
    %560 = vmatprep.subr.bf16.mxu0 0
    %561 = vmatpush1.bf16.msra.mxu0 %v543
    %562 = vmatprep.subr.bf16.mxu0 0
    %563 = vmatpush1.bf16.msra.mxu0 %v544
    %564 = vmatprep.subr.bf16.mxu0 0
    %565 = vmatpush1.bf16.msra.mxu0 %v545
    %566 = vmatprep.subr.bf16.mxu0 0
    %567 = vmatpush1.bf16.msra.mxu0 %v546
    %568 = vmatprep.subr.bf16.mxu0 0
    %569 = vmatpush1.bf16.msra.mxu0 %v547
    %570 = vmatprep.subr.bf16.mxu0 0
    %571 = vmatpush1.bf16.msra.mxu0 %v548
    %572 = vmatprep.subr.bf16.mxu0 0
    %573 = vmatpush1.bf16.msra.mxu0 %v549
    %574 = vmatprep.subr.bf16.mxu0 0
    %575 = vmatpush1.bf16.msra.mxu0 0
    %576 = vmatprep.subr.bf16.mxu0 0
    %577 = vmatpush1.bf16.msra.mxu0 0
    %578 = vmatprep.subr.bf16.mxu0 0
    %579 = vmatpush1.bf16.msra.mxu0 0
    %580 = vmatprep.subr.bf16.mxu0 0
    %581 = vmatpush1.bf16.msra.mxu0 0
    %582 = vmatprep.subr.bf16.mxu0 0
    %583 = vmatpush1.bf16.msra.mxu0 0
    %584 = vmatprep.subr.bf16.mxu0 0
    %585 = vmatpush1.bf16.msra.mxu0 0
    %586 = vmatprep.subr.bf16.mxu0 0
    %587 = vmatpush1.bf16.msra.mxu0 0
    %588 = vmatprep.subr.bf16.mxu0 0
    %589 = vmatpush1.bf16.msra.mxu0 0
    %590 = vmatprep.mubr.bf16.mxu0 0
    %591 = vmatmul.mubr.bf16.gmra.mrb[0].mxu0 %v488
    %v592 = vpop.f32.mrb[0].mxu0
    %v593 = vadd.f32 %v509, %v592
    %v594 = vpop.f32.mrb[0].mxu0
    %v595 = vpop.f32.mrb[0].mxu0
    %v596 = vadd.f32 %v509, %v595
    %v597 = vpop.f32.mrb[0].mxu0
    %598 = vdwg.mxu0
    %599 = vst [vmem:[%s3] sm:$0xff] %v593
    %600 = vst [vmem:[%s3 + $0x8] sm:$0xff] %v596
    // Predicated region
    $region18: #{popnet_forward.1} parent=1 // pred_check
      _
    $region19: #{popnet_forward.1} parent=1 // pred_check_branch
      %602 = sbr.rel (0) target = $region21
    $region20: #{popnet_forward.1} parent=1 // pred_region
      _
    $region21: #{popnet_forward.1} parent=1 // pred_fallthru
      _
    // Predicated region
    $region22: #{popnet_forward.1} parent=1 // pred_check
      _
    $region23: #{popnet_forward.1} parent=1 // pred_check_branch
      %604 = sbr.rel (0) target = $region25
    $region24: #{popnet_forward.1} parent=1 // pred_region
      _
    $region25: #{popnet_forward.1} parent=1 // pred_fallthru
      _
    %605 = vsyncpa [#allocation3], 1

</llo_original>
